<compile_context>
chip_gen: v5e
topology: v5e:2x2
jax: 0.10.0
libtpu: 0.0.40
codegen_flags: <defaults>
</compile_context>

<pallas_src>
import math
import functools

import jax
import jax.numpy as jnp
from jax import lax
from jax.experimental import pallas as pl
from jax.experimental.pallas import tpu as pltpu


# ------------------------------- kernel ------------------------------------

def mapping_cs_kernel(z_ref, wc_ref, bc_ref, ws_ref, bs_ref, c_ref, s_ref,
                      *, n_layers: int):
    """One batch tile [TM, F] through both mapping chains (c and s)."""
    z = z_ref[...].astype(jnp.float32)

    # F.normalize(z, dim=1) == z / max(||z||, 1e-12) == z * rsqrt(max(ss, 1e-24))
    ss = jnp.sum(z * z, axis=1, keepdims=True)
    zn = z * lax.rsqrt(jnp.maximum(ss, 1e-24))

    w_dtype = wc_ref.dtype            # bf16 fast path by default (f32 accumulate)
    xc = zn
    xs = zn
    # Static Python loop over layers (n_layers is a compile-time constant).
    # The two chains are independent -> scheduler interleaves their matmuls.
    for l in range(n_layers):
        wc = wc_ref[l]                # [F, F], eq_scale pre-folded, pre-transposed
        ws = ws_ref[l]
        bc = bc_ref[l]                # [1, F], already f32
        bs = bs_ref[l]

        yc = jnp.dot(xc.astype(w_dtype), wc,
                     preferred_element_type=jnp.float32) + bc
        ys = jnp.dot(xs.astype(w_dtype), ws,
                     preferred_element_type=jnp.float32) + bs

        # LeakyReLU(0.2): max(x, 0.2*x) is exact for all x. Stays f32 (v5e has
        # no bf16 VPU, and f32 VPU work is cheap vs the matmuls).
        xc = jnp.maximum(yc, 0.2 * yc)
        xs = jnp.maximum(ys, 0.2 * ys)

    c_ref[...] = xc.astype(c_ref.dtype)
    s_ref[...] = xs.astype(s_ref.dtype)


# ---------------------------- helpers / prep --------------------------------

def _round_up(x: int, m: int) -> int:
    return ((x + m - 1) // m) * m


def _vmem_capacity_bytes() -> int:
    """Per-TensorCore VMEM capacity; conservative fallback (v7x = 64 MiB)."""
    try:
        info = pltpu.get_tpu_info()
        cap = getattr(info, "vmem_capacity_bytes", None)
        if cap:
            return int(cap)
    except Exception:
        pass
    return 64 << 20


def _resident_spec(block_shape):
    """Constant-index (VMEM-resident) block; single-buffered when supported."""
    index_map = lambda i: (0,) * len(block_shape)
    try:
        spec = pl.BlockSpec(block_shape, index_map,
                            pipeline_mode=pl.Buffered(1))
        return spec, True
    except Exception:
        # Older jax without pipeline_mode/Buffered: fall back to default (2x buf).
        return pl.BlockSpec(block_shape, index_map), False


def prepare_params(w_c, b_c, w_s, b_s, weight_dtype=jnp.bfloat16, lane_pad=128):
    """One-time parameter preprocessing (do this at init, not per call).

    Inputs (PyTorch layout):  w_*: [L, F_out, F_in], b_*: [L, F_out]
    Returns (kernel layout):  w_*: [L, Fp, Fp] transposed with eq_scale folded,
                              b_*: [L, 1, Fp] in f32, where Fp = round_up(F, 128).
    weight_dtype=jnp.bfloat16 is the MXU fast path (f32 accumulation in-kernel);
    pass None to keep exact f32 semantics.
    """
    L, f_out, f_in = w_c.shape
    assert f_out == f_in, "MappingNetwork_cs uses square feature->feature layers"
    eq_scale = 1.0 / math.sqrt(f_in)   # EqualizedWeight c = 1/sqrt(prod(shape[1:]))
    f_pad = _round_up(f_in, lane_pad)

    def prep_w(w):
        w = jnp.transpose(w, (0, 2, 1)).astype(jnp.float32) * eq_scale  # [L,Fin,Fout]
        if f_pad != f_in:
            # Zero-padding keeps padded lanes exactly 0 through every layer
            # (zero weights in/out, zero bias, LeakyReLU(0)=0).
            w = jnp.pad(w, ((0, 0), (0, f_pad - f_in), (0, f_pad - f_out)))
        if weight_dtype is not None:
            w = w.astype(weight_dtype)
        return w

    def prep_b(b):
        b = b.astype(jnp.float32).reshape(L, 1, f_out)
        if f_pad != f_out:
            b = jnp.pad(b, ((0, 0), (0, 0), (0, f_pad - f_out)))
        return b

    return prep_w(w_c), prep_b(b_c), prep_w(w_s), prep_b(b_s)


# ------------------------------- wrapper ------------------------------------

def mapping_network_cs(z, wc, bc, ws, bs):
    """z: [B, F]; wc/ws: [L, Fp, Fp] (from prepare_params); bc/bs: [L, 1, Fp].
    Returns (c, s), each [B, F]."""
    B, F = z.shape
    L, Fp, _ = wc.shape

    # Lane-dense padding of the activations (prep already padded the params).
    z_in = jnp.pad(z, ((0, 0), (0, Fp - F))) if Fp != F else z

    # Batch tile: for tiny B use the full batch; otherwise give the grid at
    # least 2 steps (so v7x's two TensorCores both get work under "parallel"),
    # capped at 512 rows to amortize per-step overhead without blowing VMEM.
    if B <= 16:
        TM = B
    else:
        TM = min(512, max(8, _round_up(pl.cdiv(B, 2), 8)))
    grid = (pl.cdiv(B, TM),)

    # VMEM-resident, single-buffered weight/bias stacks.
    w_spec, w_single = _resident_spec((L, Fp, Fp))
    b_spec, b_single = _resident_spec((L, 1, Fp))
    act_spec = pl.BlockSpec((TM, Fp), lambda i: (i, 0))

    # Generation-aware VMEM budget.
    elt = lambda a: a.size * a.dtype.itemsize
    w_bytes = elt(wc) + elt(ws)
    b_bytes = elt(bc) + elt(bs)
    resident = w_bytes * (1 if w_single else 2) + b_bytes * (1 if b_single else 2)
    streamed = 2 * 3 * TM * Fp * z_in.dtype.itemsize       # z + 2 outs, double-buffered
    needed = resident + streamed + (4 << 20)                # compiler scratch headroom
    vmem_cap = int(min(_vmem_capacity_bytes() - (16 << 20), 100 << 20))
    vmem_limit = int(min(max(needed, 16 << 20), max(vmem_cap, 16 << 20)))
    # TODO(synk): if `needed` exceeds the cap (e.g. f32 weights with very large
    # F*L on v7x's 64 MiB VMEM), stream weights per layer with
    # pltpu.emit_pipeline (weights in pl.ANY, per-layer (Fp,Fp) tiles) instead
    # of keeping both stacks resident. bf16 default makes this rare.

    cost = pl.CostEstimate(
        flops=int(4 * B * L * Fp * Fp),          # 2 chains x L layers x 2*B*Fp*Fp
        transcendentals=int(B),                  # one rsqrt per row
        bytes_accessed=int(elt(z_in) + 2 * B * Fp * z_in.dtype.itemsize
                           + w_bytes + b_bytes))

    kernel = functools.partial(mapping_cs_kernel, n_layers=L)

    c, s = pl.pallas_call(
        kernel,
        grid=grid,
        in_specs=[act_spec, w_spec, b_spec, w_spec, b_spec],
        out_specs=(act_spec, act_spec),
        out_shape=(jax.ShapeDtypeStruct((B, Fp), z.dtype),
                   jax.ShapeDtypeStruct((B, Fp), z.dtype)),
        compiler_params=pltpu.CompilerParams(
            dimension_semantics=("parallel",),
            vmem_limit_bytes=vmem_limit),
        cost_estimate=cost,
    )(z_in, wc, bc, ws, bs)

    if Fp != F:
        c = c[:, :F]
        s = s[:, :F]
    return c, s


# ------------------------------ reference -----------------------------------

def _reference(z, w_c, b_c, w_s, b_s):
    """Pure-JAX reference in the original PyTorch layout / math order."""
    F_ = z.shape[1]
    scale = 1.0 / math.sqrt(F_)
    norm = jnp.sqrt(jnp.sum(z * z, axis=1, keepdims=True))
    zn = z / jnp.maximum(norm, 1e-12)

    def mlp(x, ws, bs):
        for l in range(ws.shape[0]):
            x = x @ (ws[l] * scale).T + bs[l]
            x = jnp.where(x >= 0, x, 0.2 * x)
        return x

    return mlp(zn, w_c, b_c), mlp(zn, w_s, b_s)


# --------------------------------- main -------------------------------------

if __name__ == "__main__":
    B, F, L = 8, 32, 2   # batch, features, n_layers (small test shapes)

    key = jax.random.PRNGKey(0)
    kz, kwc, kws = jax.random.split(key, 3)

    z = jax.random.normal(kz, (B, F), dtype=jnp.float32)
    # Parameters: weight ~ N(0,1) (torch.randn), bias = 0.0 (module default).
    w_c = jax.random.normal(kwc, (L, F, F), dtype=jnp.float32)   # [L, out, in]
    w_s = jax.random.normal(kws, (L, F, F), dtype=jnp.float32)
    b_c = jnp.zeros((L, F), dtype=jnp.float32)
    b_s = jnp.zeros((L, F), dtype=jnp.float32)

    c_ref, s_ref = _reference(z, w_c, b_c, w_s, b_s)

    # Default (bf16 weights, f32 accumulation) -> relaxed tolerance.
    wc_k, bc_k, ws_k, bs_k = prepare_params(w_c, b_c, w_s, b_s)
    c_out, s_out = mapping_network_cs(z, wc_k, bc_k, ws_k, bs_k)
    jax.block_until_ready((c_out, s_out))
    assert c_out.shape == (B, F) and s_out.shape == (B, F)
    assert jnp.allclose(c_out, c_ref, atol=2e-2, rtol=2e-2)
    assert jnp.allclose(s_out, s_ref, atol=2e-2, rtol=2e-2)

    # f32 escape hatch -> exact-semantics check.
    wc_f, bc_f, ws_f, bs_f = prepare_params(w_c, b_c, w_s, b_s, weight_dtype=None)
    c_f32, s_f32 = mapping_network_cs(z, wc_f, bc_f, ws_f, bs_f)
    jax.block_until_ready((c_f32, s_f32))
    assert jnp.allclose(c_f32, c_ref, atol=1e-4, rtol=1e-4)
    assert jnp.allclose(s_f32, s_ref, atol=1e-4, rtol=1e-4)

    print("KERNEL_OK")
</pallas_src>

<mosaic_0001>
module attributes {stable_mosaic.version = 11 : i64} {
  func.func @mapping_cs_kernel(%arg0: i32, %arg1: memref<8x128xf32, #tpu.memory_space<vmem>>, %arg2: memref<2x128x128xbf16, #tpu.memory_space<vmem>>, %arg3: memref<2x1x128xf32, #tpu.memory_space<vmem>>, %arg4: memref<2x128x128xbf16, #tpu.memory_space<vmem>>, %arg5: memref<2x1x128xf32, #tpu.memory_space<vmem>>, %arg6: memref<8x128xf32, #tpu.memory_space<vmem>>, %arg7: memref<8x128xf32, #tpu.memory_space<vmem>>) attributes {dimension_semantics = [#tpu.dimension_semantics<parallel>], iteration_bounds = array<i64: 1>, scalar_prefetch = 0 : i64, scratch_operands = 0 : i64, tpu.core_type = #tpu.core_type<tc>, window_params = [{transform_indices = @transform_0, window_bounds = array<i64: 8, 128>}, {pipeline_mode = #tpu.pipeline_mode<synchronous>, transform_indices = @transform_1, window_bounds = array<i64: 2, 128, 128>}, {pipeline_mode = #tpu.pipeline_mode<synchronous>, transform_indices = @transform_2, window_bounds = array<i64: 2, 1, 128>}, {pipeline_mode = #tpu.pipeline_mode<synchronous>, transform_indices = @transform_3, window_bounds = array<i64: 2, 128, 128>}, {pipeline_mode = #tpu.pipeline_mode<synchronous>, transform_indices = @transform_4, window_bounds = array<i64: 2, 1, 128>}, {transform_indices = @transform_5, window_bounds = array<i64: 8, 128>}, {transform_indices = @transform_6, window_bounds = array<i64: 8, 128>}]} {
    %c0 = arith.constant 0 : index
    %c0_0 = arith.constant 0 : index
    %0 = vector.load %arg1[%c0, %c0_0] : memref<8x128xf32, #tpu.memory_space<vmem>>, vector<8x128xf32>
    %1 = arith.mulf %0, %0 : vector<8x128xf32>
    %cst = arith.constant dense<0.000000e+00> : vector<8xf32>
    %2 = vector.multi_reduction <add>, %1, %cst [1] : vector<8x128xf32> to vector<8xf32>
    %3 = vector.shape_cast %2 : vector<8xf32> to vector<8x1xf32>
    %cst_1 = arith.constant 1.000000e-24 : f32
    %4 = vector.broadcast %cst_1 : f32 to vector<8x1xf32>
    %5 = arith.maximumf %3, %4 : vector<8x1xf32>
    %6 = math.rsqrt %5 : vector<8x1xf32>
    %7 = vector.broadcast %6 : vector<8x1xf32> to vector<8x128xf32>
    %8 = arith.mulf %0, %7 : vector<8x128xf32>
    %c0_2 = arith.constant 0 : index
    %c0_3 = arith.constant 0 : index
    %c0_4 = arith.constant 0 : index
    %9 = vector.load %arg2[%c0_2, %c0_3, %c0_4] : memref<2x128x128xbf16, #tpu.memory_space<vmem>>, vector<1x128x128xbf16>
    %10 = vector.shape_cast %9 : vector<1x128x128xbf16> to vector<128x128xbf16>
    %c0_5 = arith.constant 0 : index
    %c0_6 = arith.constant 0 : index
    %c0_7 = arith.constant 0 : index
    %11 = vector.load %arg4[%c0_5, %c0_6, %c0_7] : memref<2x128x128xbf16, #tpu.memory_space<vmem>>, vector<1x128x128xbf16>
    %12 = vector.shape_cast %11 : vector<1x128x128xbf16> to vector<128x128xbf16>
    %c0_8 = arith.constant 0 : index
    %c0_9 = arith.constant 0 : index
    %c0_10 = arith.constant 0 : index
    %13 = vector.load %arg3[%c0_8, %c0_9, %c0_10] : memref<2x1x128xf32, #tpu.memory_space<vmem>>, vector<1x1x128xf32>
    %14 = vector.shape_cast %13 : vector<1x1x128xf32> to vector<1x128xf32>
    %c0_11 = arith.constant 0 : index
    %c0_12 = arith.constant 0 : index
    %c0_13 = arith.constant 0 : index
    %15 = vector.load %arg5[%c0_11, %c0_12, %c0_13] : memref<2x1x128xf32, #tpu.memory_space<vmem>>, vector<1x1x128xf32>
    %16 = vector.shape_cast %15 : vector<1x1x128xf32> to vector<1x128xf32>
    %17 = arith.truncf %8 : vector<8x128xf32> to vector<8x128xbf16>
    %cst_14 = arith.constant dense<0.000000e+00> : vector<8x128xf32>
    %18 = tpu.matmul %17, %10, %cst_14 {dimension_numbers = #tpu.dot_dimension_numbers<[1], [0], [0], [1], [0, 0, 1, 1], [], []>} : vector<8x128xbf16>, vector<128x128xbf16>, vector<8x128xf32> -> vector<8x128xf32>
    %19 = vector.broadcast %14 : vector<1x128xf32> to vector<8x128xf32>
    %20 = arith.addf %18, %19 : vector<8x128xf32>
    %21 = arith.truncf %8 : vector<8x128xf32> to vector<8x128xbf16>
    %cst_15 = arith.constant dense<0.000000e+00> : vector<8x128xf32>
    %22 = tpu.matmul %21, %12, %cst_15 {dimension_numbers = #tpu.dot_dimension_numbers<[1], [0], [0], [1], [0, 0, 1, 1], [], []>} : vector<8x128xbf16>, vector<128x128xbf16>, vector<8x128xf32> -> vector<8x128xf32>
    %23 = vector.broadcast %16 : vector<1x128xf32> to vector<8x128xf32>
    %24 = arith.addf %22, %23 : vector<8x128xf32>
    %cst_16 = arith.constant 2.000000e-01 : f32
    %25 = vector.broadcast %cst_16 : f32 to vector<8x128xf32>
    %26 = arith.mulf %25, %20 : vector<8x128xf32>
    %27 = arith.maximumf %20, %26 : vector<8x128xf32>
    %cst_17 = arith.constant 2.000000e-01 : f32
    %28 = vector.broadcast %cst_17 : f32 to vector<8x128xf32>
    %29 = arith.mulf %28, %24 : vector<8x128xf32>
    %30 = arith.maximumf %24, %29 : vector<8x128xf32>
    %c1 = arith.constant 1 : index
    %c0_18 = arith.constant 0 : index
    %c0_19 = arith.constant 0 : index
    %31 = vector.load %arg2[%c1, %c0_18, %c0_19] : memref<2x128x128xbf16, #tpu.memory_space<vmem>>, vector<1x128x128xbf16>
    %32 = vector.shape_cast %31 : vector<1x128x128xbf16> to vector<128x128xbf16>
    %c1_20 = arith.constant 1 : index
    %c0_21 = arith.constant 0 : index
    %c0_22 = arith.constant 0 : index
    %33 = vector.load %arg4[%c1_20, %c0_21, %c0_22] : memref<2x128x128xbf16, #tpu.memory_space<vmem>>, vector<1x128x128xbf16>
    %34 = vector.shape_cast %33 : vector<1x128x128xbf16> to vector<128x128xbf16>
    %c1_23 = arith.constant 1 : index
    %c0_24 = arith.constant 0 : index
    %c0_25 = arith.constant 0 : index
    %35 = vector.load %arg3[%c1_23, %c0_24, %c0_25] : memref<2x1x128xf32, #tpu.memory_space<vmem>>, vector<1x1x128xf32>
    %36 = vector.shape_cast %35 : vector<1x1x128xf32> to vector<1x128xf32>
    %c1_26 = arith.constant 1 : index
    %c0_27 = arith.constant 0 : index
    %c0_28 = arith.constant 0 : index
    %37 = vector.load %arg5[%c1_26, %c0_27, %c0_28] : memref<2x1x128xf32, #tpu.memory_space<vmem>>, vector<1x1x128xf32>
    %38 = vector.shape_cast %37 : vector<1x1x128xf32> to vector<1x128xf32>
    %39 = arith.truncf %27 : vector<8x128xf32> to vector<8x128xbf16>
    %cst_29 = arith.constant dense<0.000000e+00> : vector<8x128xf32>
    %40 = tpu.matmul %39, %32, %cst_29 {dimension_numbers = #tpu.dot_dimension_numbers<[1], [0], [0], [1], [0, 0, 1, 1], [], []>} : vector<8x128xbf16>, vector<128x128xbf16>, vector<8x128xf32> -> vector<8x128xf32>
    %41 = vector.broadcast %36 : vector<1x128xf32> to vector<8x128xf32>
    %42 = arith.addf %40, %41 : vector<8x128xf32>
    %43 = arith.truncf %30 : vector<8x128xf32> to vector<8x128xbf16>
    %cst_30 = arith.constant dense<0.000000e+00> : vector<8x128xf32>
    %44 = tpu.matmul %43, %34, %cst_30 {dimension_numbers = #tpu.dot_dimension_numbers<[1], [0], [0], [1], [0, 0, 1, 1], [], []>} : vector<8x128xbf16>, vector<128x128xbf16>, vector<8x128xf32> -> vector<8x128xf32>
    %45 = vector.broadcast %38 : vector<1x128xf32> to vector<8x128xf32>
    %46 = arith.addf %44, %45 : vector<8x128xf32>
    %cst_31 = arith.constant 2.000000e-01 : f32
    %47 = vector.broadcast %cst_31 : f32 to vector<8x128xf32>
    %48 = arith.mulf %47, %42 : vector<8x128xf32>
    %49 = arith.maximumf %42, %48 : vector<8x128xf32>
    %cst_32 = arith.constant 2.000000e-01 : f32
    %50 = vector.broadcast %cst_32 : f32 to vector<8x128xf32>
    %51 = arith.mulf %50, %46 : vector<8x128xf32>
    %52 = arith.maximumf %46, %51 : vector<8x128xf32>
    %c0_33 = arith.constant 0 : index
    %c0_34 = arith.constant 0 : index
    %53 = vector.load %arg6[%c0_33, %c0_34] : memref<8x128xf32, #tpu.memory_space<vmem>>, vector<8x128xf32>
    tpu.vector_store %arg6[%c0_33, %c0_34], %49 {strides = array<i32>} : memref<8x128xf32, #tpu.memory_space<vmem>>, vector<8x128xf32>,
    %c0_35 = arith.constant 0 : index
    %c0_36 = arith.constant 0 : index
    %54 = vector.load %arg7[%c0_35, %c0_36] : memref<8x128xf32, #tpu.memory_space<vmem>>, vector<8x128xf32>
    tpu.vector_store %arg7[%c0_35, %c0_36], %52 {strides = array<i32>} : memref<8x128xf32, #tpu.memory_space<vmem>>, vector<8x128xf32>,
    return
  }
  func.func @transform_0(%arg0: i32) -> (i32, i32) {
    %c0_i32 = arith.constant 0 : i32
    %c0_i32_0 = arith.constant 0 : i32
    return %arg0, %c0_i32 : i32, i32
  }
  func.func @transform_1(%arg0: i32) -> (i32, i32, i32) {
    %c0_i32 = arith.constant 0 : i32
    %c0_i32_0 = arith.constant 0 : i32
    %c0_i32_1 = arith.constant 0 : i32
    %c0_i32_2 = arith.constant 0 : i32
    return %c0_i32, %c0_i32_0, %c0_i32_1 : i32, i32, i32
  }
  func.func @transform_2(%arg0: i32) -> (i32, i32, i32) {
    %c0_i32 = arith.constant 0 : i32
    %c0_i32_0 = arith.constant 0 : i32
    %c0_i32_1 = arith.constant 0 : i32
    %c0_i32_2 = arith.constant 0 : i32
    return %c0_i32, %c0_i32_0, %c0_i32_1 : i32, i32, i32
  }
  func.func @transform_3(%arg0: i32) -> (i32, i32, i32) {
    %c0_i32 = arith.constant 0 : i32
    %c0_i32_0 = arith.constant 0 : i32
    %c0_i32_1 = arith.constant 0 : i32
    %c0_i32_2 = arith.constant 0 : i32
    return %c0_i32, %c0_i32_0, %c0_i32_1 : i32, i32, i32
  }
  func.func @transform_4(%arg0: i32) -> (i32, i32, i32) {
    %c0_i32 = arith.constant 0 : i32
    %c0_i32_0 = arith.constant 0 : i32
    %c0_i32_1 = arith.constant 0 : i32
    %c0_i32_2 = arith.constant 0 : i32
    return %c0_i32, %c0_i32_0, %c0_i32_1 : i32, i32, i32
  }
  func.func @transform_5(%arg0: i32) -> (i32, i32) {
    %c0_i32 = arith.constant 0 : i32
    %c0_i32_0 = arith.constant 0 : i32
    return %arg0, %c0_i32 : i32, i32
  }
  func.func @transform_6(%arg0: i32) -> (i32, i32) {
    %c0_i32 = arith.constant 0 : i32
    %c0_i32_0 = arith.constant 0 : i32
    return %arg0, %c0_i32 : i32, i32
  }
}

</mosaic_0001>

<llo_original>
// kernel: tpu_custom_call.1
$region0: #{tpu_custom_call.1}
  #allocation0 [shape = 'u32[]', space=smem, size = 0x4, offset = 0x4, fixed_abs, tag = 'smem constant byte address 0x4 - core index']
  #allocation1 [shape = 'u32[72,128]{1,0:T(1,128)}', space=vmem, size = 0x9000, scoped, tag = 'internal scratch']
  %s0 = inlined_call_operand.hbm [shape: f32[8,128], index: 0, kind: input, shape index: {}]
  %s1 = inlined_call_operand.hbm [shape: bf16[2,128,128], index: 1, kind: input, shape index: {}]
  %s2 = inlined_call_operand.hbm [shape: f32[2,1,128], index: 2, kind: input, shape index: {}]
  %s3 = inlined_call_operand.hbm [shape: bf16[2,128,128], index: 3, kind: input, shape index: {}]
  %s4 = inlined_call_operand.vmem [shape: f32[2,1,128], index: 4, kind: input, shape index: {}]
  %s5 = inlined_call_operand.hbm [shape: f32[8,128], index: 5, kind: output, shape index: {0}]
  %s6 = inlined_call_operand.hbm [shape: f32[8,128], index: 6, kind: output, shape index: {1}]
  %7 = xla_tuple %s5, %s6
  %s8 = sld [smem:[#allocation0]]
  $region54: #{tpu_custom_call.1} parent=0
    _
  %s10 = ssub.s32 1, %s8
  %s11 = scalar_select 0, %s10, %s8
  $region1: #{tpu_custom_call.1} parent=0
    #allocation2 [shape = 'u8[4096]{0}', space=vmem, size = 0x1000, scoped, tag = 'input window, operand 0, single buffered']
    #allocation3 [shape = 's32[1]{0}', space=sflag, size = 0x4, scoped, tag = 'scoped memory for tpu_custom_call.1']
    #allocation4 [shape = 's32[1]{0}', space=sflag, size = 0x4, scoped, tag = 'scoped memory for tpu_custom_call.1']
    #allocation5 [shape = 'u8[65536]{0}', space=vmem, size = 0x10000, scoped, tag = 'input window, operand 1, single buffered']
    #allocation6 [shape = 's32[1]{0}', space=sflag, size = 0x4, scoped, tag = 'scoped memory for tpu_custom_call.1']
    #allocation7 [shape = 'u8[1024]{0}', space=vmem, size = 0x400, scoped, tag = 'input window, operand 2, single buffered']
    #allocation8 [shape = 'u8[65536]{0}', space=vmem, size = 0x10000, scoped, tag = 'input window, operand 3, single buffered']
    #allocation9 [shape = 's32[1]{0}', space=sflag, size = 0x4, scoped, tag = 'scoped memory for tpu_custom_call.1']
    #allocation10 [shape = 'u8[4096]{0}', space=vmem, size = 0x1000, scoped, tag = 'output window, operand 0, single buffered']
    #allocation11 [shape = 'u8[4096]{0}', space=vmem, size = 0x1000, scoped, tag = 'output window, operand 1, single buffered']
    #allocation12 [shape = 's32[1]{0}', space=sflag, size = 0x4, scoped, tag = 'scoped memory for tpu_custom_call.1']
    %12 = vsyncpa [#allocation3], 0
    %13 = vsyncpa [#allocation6], 0
    %14 = vsyncpa [#allocation9], 0
    %15 = vsyncpa [#allocation4], 0
    %16 = vsyncpa [#allocation12], 0
    // Predicated region
    $region2: #{tpu_custom_call.1} parent=1 // pred_check
      _
    $region3: #{tpu_custom_call.1} parent=1 // pred_check_branch
      %18 = sbr.rel (0) target = $region5
    $region4: #{tpu_custom_call.1} parent=1 // pred_region
      %20 = vsyncadd [#allocation3], 0
      %s22 = sshll.u32 %s0, 4
      %s23 = int_to_ptr.hbm [resolvable:$true] %s22
      %s24 = sshll.u32 [#allocation2], 4
      %s25 = int_to_ptr.vmem [resolvable:$true] %s24
      %27 = dma.hbm_to_vmem [thread:$0]  %s23, 128, %s25, [#allocation3]
    $region5: #{tpu_custom_call.1} parent=1 // pred_fallthru
      _
    // Predicated region
    $region6: #{tpu_custom_call.1} parent=1 // pred_check
      _
    $region7: #{tpu_custom_call.1} parent=1 // pred_check_branch
      %29 = sbr.rel (0) target = $region9
    $region8: #{tpu_custom_call.1} parent=1 // pred_region
      %31 = vsyncadd [#allocation6], 0
      %s32 = sshll.u32 %s1, 4
      %s33 = int_to_ptr.hbm [resolvable:$true] %s32
      %s34 = sshll.u32 [#allocation5], 4
      %s35 = int_to_ptr.vmem [resolvable:$true] %s34
      %40 = dma.hbm_to_vmem [thread:$0]  %s33, 2048, %s35, [#allocation6], 64, 64, 4
    $region9: #{tpu_custom_call.1} parent=1 // pred_fallthru
      _
    // Predicated region
    $region10: #{tpu_custom_call.1} parent=1 // pred_check
      _
    $region11: #{tpu_custom_call.1} parent=1 // pred_check_branch
      %42 = sbr.rel (0) target = $region13
    $region12: #{tpu_custom_call.1} parent=1 // pred_region
      %44 = vsyncadd [#allocation6], 0
      %s45 = sshll.u32 %s2, 4
      %s46 = int_to_ptr.hbm [resolvable:$true] %s45
      %s47 = sshll.u32 [#allocation7], 4
      %s48 = int_to_ptr.vmem [resolvable:$true] %s47
      %53 = dma.hbm_to_vmem [thread:$0]  %s46, 32, %s48, [#allocation6], 16, 16, 1
    $region13: #{tpu_custom_call.1} parent=1 // pred_fallthru
      _
    // Predicated region
    $region14: #{tpu_custom_call.1} parent=1 // pred_check
      _
    $region15: #{tpu_custom_call.1} parent=1 // pred_check_branch
      %55 = sbr.rel (0) target = $region17
    $region16: #{tpu_custom_call.1} parent=1 // pred_region
      %57 = vsyncadd [#allocation9], 0
      %s58 = sshll.u32 %s3, 4
      %s59 = int_to_ptr.hbm [resolvable:$true] %s58
      %s60 = sshll.u32 [#allocation8], 4
      %s61 = int_to_ptr.vmem [resolvable:$true] %s60
      %66 = dma.hbm_to_vmem [thread:$0]  %s59, 2048, %s61, [#allocation9], 64, 64, 4
    $region17: #{tpu_custom_call.1} parent=1 // pred_fallthru
      _
    // Predicated region
    $region18: #{tpu_custom_call.1} parent=1 // pred_check
      _
    $region19: #{tpu_custom_call.1} parent=1 // pred_check_branch
      %68 = sbr.rel (0) target = $region21
    $region20: #{tpu_custom_call.1} parent=1 // pred_region
      _
    $region21: #{tpu_custom_call.1} parent=1 // pred_fallthru
      _
    // Predicated region
    $region22: #{tpu_custom_call.1} parent=1 // pred_check
      _
    $region23: #{tpu_custom_call.1} parent=1 // pred_check_branch
      %70 = sbr.rel (0) target = $region25
    $region24: #{tpu_custom_call.1} parent=1 // pred_region
      %72 = dma.done [#allocation3], 128
    $region25: #{tpu_custom_call.1} parent=1 // pred_fallthru
      _
    // Predicated region
    $region26: #{tpu_custom_call.1} parent=1 // pred_check
      _
    $region27: #{tpu_custom_call.1} parent=1 // pred_check_branch
      %74 = sbr.rel (0) target = $region29
    $region28: #{tpu_custom_call.1} parent=1 // pred_region
      %76 = dma.done [#allocation6], 2048
    $region29: #{tpu_custom_call.1} parent=1 // pred_fallthru
      _
    // Predicated region
    $region30: #{tpu_custom_call.1} parent=1 // pred_check
      _
    $region31: #{tpu_custom_call.1} parent=1 // pred_check_branch
      %78 = sbr.rel (0) target = $region33
    $region32: #{tpu_custom_call.1} parent=1 // pred_region
      %80 = dma.done [#allocation6], 32
    $region33: #{tpu_custom_call.1} parent=1 // pred_fallthru
      _
    // Predicated region
    $region34: #{tpu_custom_call.1} parent=1 // pred_check
      _
    $region35: #{tpu_custom_call.1} parent=1 // pred_check_branch
      %82 = sbr.rel (0) target = $region37
    $region36: #{tpu_custom_call.1} parent=1 // pred_region
      %84 = dma.done [#allocation9], 2048
    $region37: #{tpu_custom_call.1} parent=1 // pred_fallthru
      _
    %v85 = vld [vmem:[#allocation2] sm:$0xff]
    %v86 = vmul.f32 %v85, %v85
    %87 = vadd.xlane.f32.xlu0 %v86
    %v88 = vpop.xlane.xlu0 %87
    %v89 = vmax.f32 %v88, 1e-24
    %v90 = vrsqrt.pop %v89
    %v91 = vmul.f32 %v90, %v89
    %v92 = vmul.f32 %v91, %v90
    %v93 = vmul.f32 0.5, %v92
    %v94 = vsub.f32 1.5, %v93
    %v95 = vmul.f32 %v90, %v94
    %vm96 = vweird.f32 %v89
    %vm97 = vweird.f32 %v90
    %vm98 = vmor %vm96, %vm97
    %v99 = vsel %vm98, %v90, %v95
    %v100 = vmul.f32 %v85, %v99
    %v101 = vld [vmem:[#allocation5] sm:$0xf]
    %v102 = vld [vmem:[#allocation5 + $0x4] sm:$0xf]
    %v103 = vld [vmem:[#allocation5 + $0x8] sm:$0xf]
    %v104 = vld [vmem:[#allocation5 + $0xc] sm:$0xf]
    %v105 = vld [vmem:[#allocation5 + $0x10] sm:$0xf]
    %v106 = vld [vmem:[#allocation5 + $0x14] sm:$0xf]
    %v107 = vld [vmem:[#allocation5 + $0x18] sm:$0xf]
    %v108 = vld [vmem:[#allocation5 + $0x1c] sm:$0xf]
    %v109 = vld [vmem:[#allocation5 + $0x20] sm:$0xf]
    %v110 = vld [vmem:[#allocation5 + $0x24] sm:$0xf]
    %v111 = vld [vmem:[#allocation5 + $0x28] sm:$0xf]
    %v112 = vld [vmem:[#allocation5 + $0x2c] sm:$0xf]
    %v113 = vld [vmem:[#allocation5 + $0x30] sm:$0xf]
    %v114 = vld [vmem:[#allocation5 + $0x34] sm:$0xf]
    %v115 = vld [vmem:[#allocation5 + $0x38] sm:$0xf]
    %v116 = vld [vmem:[#allocation5 + $0x3c] sm:$0xf]
    %v117 = vld [vmem:[#allocation8] sm:$0xf]
    %v118 = vld [vmem:[#allocation8 + $0x4] sm:$0xf]
    %v119 = vld [vmem:[#allocation8 + $0x8] sm:$0xf]
    %v120 = vld [vmem:[#allocation8 + $0xc] sm:$0xf]
    %v121 = vld [vmem:[#allocation8 + $0x10] sm:$0xf]
    %v122 = vld [vmem:[#allocation8 + $0x14] sm:$0xf]
    %v123 = vld [vmem:[#allocation8 + $0x18] sm:$0xf]
    %v124 = vld [vmem:[#allocation8 + $0x1c] sm:$0xf]
    %v125 = vld [vmem:[#allocation8 + $0x20] sm:$0xf]
    %v126 = vld [vmem:[#allocation8 + $0x24] sm:$0xf]
    %v127 = vld [vmem:[#allocation8 + $0x28] sm:$0xf]
    %v128 = vld [vmem:[#allocation8 + $0x2c] sm:$0xf]
    %v129 = vld [vmem:[#allocation8 + $0x30] sm:$0xf]
    %v130 = vld [vmem:[#allocation8 + $0x34] sm:$0xf]
    %v131 = vld [vmem:[#allocation8 + $0x38] sm:$0xf]
    %v132 = vld [vmem:[#allocation8 + $0x3c] sm:$0xf]
    %v133 = vld [vmem:[#allocation7] sm:$0x1]
    %v134 = vld [vmem:[%s4] sm:$0x1]
    %v135 = vpack.c.bf16 %v100, %v100
    %v137 = vperm.slane %v133, 0
    %v155 = vunpack.c.l.b16 %v101
    %v156 = vunpack.c.l.b16 %v102
    %v157 = vunpack.c.l.b16 %v103
    %v158 = vunpack.c.l.b16 %v104
    %v159 = vunpack.c.l.b16 %v105
    %v160 = vunpack.c.l.b16 %v106
    %v161 = vunpack.c.l.b16 %v107
    %v162 = vunpack.c.l.b16 %v108
    %v163 = vunpack.c.l.b16 %v109
    %v164 = vunpack.c.l.b16 %v110
    %v165 = vunpack.c.l.b16 %v111
    %v166 = vunpack.c.l.b16 %v112
    %v167 = vunpack.c.l.b16 %v113
    %v168 = vunpack.c.l.b16 %v114
    %v169 = vunpack.c.l.b16 %v115
    %v170 = vunpack.c.l.b16 %v116
    %v171 = vpack.c.b16 %v156, %v155
    %v172 = vpack.c.b16 %v158, %v157
    %v173 = vpack.c.b16 %v160, %v159
    %v174 = vpack.c.b16 %v162, %v161
    %v175 = vpack.c.b16 %v164, %v163
    %v176 = vpack.c.b16 %v166, %v165
    %v177 = vpack.c.b16 %v168, %v167
    %v178 = vpack.c.b16 %v170, %v169
    %187 = vmatpush.bf16.msra.mxu0 %v178
    %188 = vmatpush.bf16.msra.mxu0 %v177
    %189 = vmatpush.bf16.msra.mxu0 %v176
    %190 = vmatpush.bf16.msra.mxu0 %v175
    %191 = vmatpush.bf16.msra.mxu0 %v174
    %192 = vmatpush.bf16.msra.mxu0 %v173
    %193 = vmatpush.bf16.msra.mxu0 %v172
    %194 = vmatpush.bf16.msra.mxu0 %v171
    %195 = vmatmul.bf16.gmra.mxu0 %v135
    %v196 = vpop.f32.mrf.mxu0
    %v197 = vadd.f32 %v137, %v196
    %v198 = vpop.f32.mrf.mxu0
    %199 = vdwg.mxu0
    %v201 = vperm.slane %v134, 0
    %v219 = vunpack.c.l.b16 %v117
    %v220 = vunpack.c.l.b16 %v118
    %v221 = vunpack.c.l.b16 %v119
    %v222 = vunpack.c.l.b16 %v120
    %v223 = vunpack.c.l.b16 %v121
    %v224 = vunpack.c.l.b16 %v122
    %v225 = vunpack.c.l.b16 %v123
    %v226 = vunpack.c.l.b16 %v124
    %v227 = vunpack.c.l.b16 %v125
    %v228 = vunpack.c.l.b16 %v126
    %v229 = vunpack.c.l.b16 %v127
    %v230 = vunpack.c.l.b16 %v128
    %v231 = vunpack.c.l.b16 %v129
    %v232 = vunpack.c.l.b16 %v130
    %v233 = vunpack.c.l.b16 %v131
    %v234 = vunpack.c.l.b16 %v132
    %v235 = vpack.c.b16 %v220, %v219
    %v236 = vpack.c.b16 %v222, %v221
    %v237 = vpack.c.b16 %v224, %v223
    %v238 = vpack.c.b16 %v226, %v225
    %v239 = vpack.c.b16 %v228, %v227
    %v240 = vpack.c.b16 %v230, %v229
    %v241 = vpack.c.b16 %v232, %v231
    %v242 = vpack.c.b16 %v234, %v233
    %251 = vmatpush.bf16.msra.mxu0 %v242
    %252 = vmatpush.bf16.msra.mxu0 %v241
    %253 = vmatpush.bf16.msra.mxu0 %v240
    %254 = vmatpush.bf16.msra.mxu0 %v239
    %255 = vmatpush.bf16.msra.mxu0 %v238
    %256 = vmatpush.bf16.msra.mxu0 %v237
    %257 = vmatpush.bf16.msra.mxu0 %v236
    %258 = vmatpush.bf16.msra.mxu0 %v235
    %259 = vmatmul.bf16.gmra.mxu0 %v135
    %v260 = vpop.f32.mrf.mxu0
    %v261 = vadd.f32 %v201, %v260
    %v262 = vpop.f32.mrf.mxu0
    %263 = vdwg.mxu0
    %v264 = vmul.f32 %v197, 0.2
    %v265 = vmax.f32 %v197, %v264
    %v266 = vmul.f32 %v261, 0.2
    %v267 = vmax.f32 %v261, %v266
    %s268 = scalar_lea.vmem [#allocation5], 64
    %v269 = vld [vmem:[%s268] sm:$0xf]
    %v270 = vld [vmem:[%s268 + $0x4] sm:$0xf]
    %v271 = vld [vmem:[%s268 + $0x8] sm:$0xf]
    %v272 = vld [vmem:[%s268 + $0xc] sm:$0xf]
    %v273 = vld [vmem:[%s268 + $0x10] sm:$0xf]
    %v274 = vld [vmem:[%s268 + $0x14] sm:$0xf]
    %v275 = vld [vmem:[%s268 + $0x18] sm:$0xf]
    %v276 = vld [vmem:[%s268 + $0x1c] sm:$0xf]
    %v277 = vld [vmem:[%s268 + $0x20] sm:$0xf]
    %v278 = vld [vmem:[%s268 + $0x24] sm:$0xf]
    %v279 = vld [vmem:[%s268 + $0x28] sm:$0xf]
    %v280 = vld [vmem:[%s268 + $0x2c] sm:$0xf]
    %v281 = vld [vmem:[%s268 + $0x30] sm:$0xf]
    %v282 = vld [vmem:[%s268 + $0x34] sm:$0xf]
    %v283 = vld [vmem:[%s268 + $0x38] sm:$0xf]
    %v284 = vld [vmem:[%s268 + $0x3c] sm:$0xf]
    %s285 = scalar_lea.vmem [#allocation8], 64
    %v286 = vld [vmem:[%s285] sm:$0xf]
    %v287 = vld [vmem:[%s285 + $0x4] sm:$0xf]
    %v288 = vld [vmem:[%s285 + $0x8] sm:$0xf]
    %v289 = vld [vmem:[%s285 + $0xc] sm:$0xf]
    %v290 = vld [vmem:[%s285 + $0x10] sm:$0xf]
    %v291 = vld [vmem:[%s285 + $0x14] sm:$0xf]
    %v292 = vld [vmem:[%s285 + $0x18] sm:$0xf]
    %v293 = vld [vmem:[%s285 + $0x1c] sm:$0xf]
    %v294 = vld [vmem:[%s285 + $0x20] sm:$0xf]
    %v295 = vld [vmem:[%s285 + $0x24] sm:$0xf]
    %v296 = vld [vmem:[%s285 + $0x28] sm:$0xf]
    %v297 = vld [vmem:[%s285 + $0x2c] sm:$0xf]
    %v298 = vld [vmem:[%s285 + $0x30] sm:$0xf]
    %v299 = vld [vmem:[%s285 + $0x34] sm:$0xf]
    %v300 = vld [vmem:[%s285 + $0x38] sm:$0xf]
    %v301 = vld [vmem:[%s285 + $0x3c] sm:$0xf]
    %s302 = scalar_lea.vmem [#allocation7], 1
    %v303 = vld [vmem:[%s302] sm:$0x1]
    %s304 = scalar_lea.vmem %s4, 1
    %v305 = vld [vmem:[%s304] sm:$0x1]
    %v306 = vpack.c.bf16 %v265, %v265
    %v308 = vperm.slane %v303, 0
    %v326 = vunpack.c.l.b16 %v269
    %v327 = vunpack.c.l.b16 %v270
    %v328 = vunpack.c.l.b16 %v271
    %v329 = vunpack.c.l.b16 %v272
    %v330 = vunpack.c.l.b16 %v273
    %v331 = vunpack.c.l.b16 %v274
    %v332 = vunpack.c.l.b16 %v275
    %v333 = vunpack.c.l.b16 %v276
    %v334 = vunpack.c.l.b16 %v277
    %v335 = vunpack.c.l.b16 %v278
    %v336 = vunpack.c.l.b16 %v279
    %v337 = vunpack.c.l.b16 %v280
    %v338 = vunpack.c.l.b16 %v281
    %v339 = vunpack.c.l.b16 %v282
    %v340 = vunpack.c.l.b16 %v283
    %v341 = vunpack.c.l.b16 %v284
    %v342 = vpack.c.b16 %v327, %v326
    %v343 = vpack.c.b16 %v329, %v328
    %v344 = vpack.c.b16 %v331, %v330
    %v345 = vpack.c.b16 %v333, %v332
    %v346 = vpack.c.b16 %v335, %v334
    %v347 = vpack.c.b16 %v337, %v336
    %v348 = vpack.c.b16 %v339, %v338
    %v349 = vpack.c.b16 %v341, %v340
    %358 = vmatpush.bf16.msra.mxu0 %v349
    %359 = vmatpush.bf16.msra.mxu0 %v348
    %360 = vmatpush.bf16.msra.mxu0 %v347
    %361 = vmatpush.bf16.msra.mxu0 %v346
    %362 = vmatpush.bf16.msra.mxu0 %v345
    %363 = vmatpush.bf16.msra.mxu0 %v344
    %364 = vmatpush.bf16.msra.mxu0 %v343
    %365 = vmatpush.bf16.msra.mxu0 %v342
    %366 = vmatmul.bf16.gmra.mxu0 %v306
    %v367 = vpop.f32.mrf.mxu0
    %v368 = vadd.f32 %v308, %v367
    %v369 = vpop.f32.mrf.mxu0
    %370 = vdwg.mxu0
    %v371 = vpack.c.bf16 %v267, %v267
    %v373 = vperm.slane %v305, 0
    %v391 = vunpack.c.l.b16 %v286
    %v392 = vunpack.c.l.b16 %v287
    %v393 = vunpack.c.l.b16 %v288
    %v394 = vunpack.c.l.b16 %v289
    %v395 = vunpack.c.l.b16 %v290
    %v396 = vunpack.c.l.b16 %v291
    %v397 = vunpack.c.l.b16 %v292
    %v398 = vunpack.c.l.b16 %v293
    %v399 = vunpack.c.l.b16 %v294
    %v400 = vunpack.c.l.b16 %v295
    %v401 = vunpack.c.l.b16 %v296
    %v402 = vunpack.c.l.b16 %v297
    %v403 = vunpack.c.l.b16 %v298
    %v404 = vunpack.c.l.b16 %v299
    %v405 = vunpack.c.l.b16 %v300
    %v406 = vunpack.c.l.b16 %v301
    %v407 = vpack.c.b16 %v392, %v391
    %v408 = vpack.c.b16 %v394, %v393
    %v409 = vpack.c.b16 %v396, %v395
    %v410 = vpack.c.b16 %v398, %v397
    %v411 = vpack.c.b16 %v400, %v399
    %v412 = vpack.c.b16 %v402, %v401
    %v413 = vpack.c.b16 %v404, %v403
    %v414 = vpack.c.b16 %v406, %v405
    %423 = vmatpush.bf16.msra.mxu0 %v414
    %424 = vmatpush.bf16.msra.mxu0 %v413
    %425 = vmatpush.bf16.msra.mxu0 %v412
    %426 = vmatpush.bf16.msra.mxu0 %v411
    %427 = vmatpush.bf16.msra.mxu0 %v410
    %428 = vmatpush.bf16.msra.mxu0 %v409
    %429 = vmatpush.bf16.msra.mxu0 %v408
    %430 = vmatpush.bf16.msra.mxu0 %v407
    %431 = vmatmul.bf16.gmra.mxu0 %v371
    %v432 = vpop.f32.mrf.mxu0
    %v433 = vadd.f32 %v373, %v432
    %v434 = vpop.f32.mrf.mxu0
    %435 = vdwg.mxu0
    %v436 = vmul.f32 %v368, 0.2
    %v437 = vmax.f32 %v368, %v436
    %v438 = vmul.f32 %v433, 0.2
    %v439 = vmax.f32 %v433, %v438
    %440 = vst [vmem:[#allocation10] sm:$0xff] %v437
    %441 = vst [vmem:[#allocation11] sm:$0xff] %v439
    // Predicated region
    $region38: #{tpu_custom_call.1} parent=1 // pred_check
      _
    $region39: #{tpu_custom_call.1} parent=1 // pred_check_branch
      %443 = sbr.rel (0) target = $region41
    $region40: #{tpu_custom_call.1} parent=1 // pred_region
      %445 = vsyncadd [#allocation4], 0
      %s447 = sshll.u32 [#allocation10], 4
      %s448 = int_to_ptr.vmem [resolvable:$true] %s447
      %s449 = sshll.u32 %s5, 4
      %s450 = int_to_ptr.hbm [resolvable:$true] %s449
      %452 = dma.vmem_to_hbm [thread:$0]  %s448, 128, %s450, [#allocation4]
    $region41: #{tpu_custom_call.1} parent=1 // pred_fallthru
      _
    // Predicated region
    $region42: #{tpu_custom_call.1} parent=1 // pred_check
      _
    $region43: #{tpu_custom_call.1} parent=1 // pred_check_branch
      %454 = sbr.rel (0) target = $region45
    $region44: #{tpu_custom_call.1} parent=1 // pred_region
      %456 = vsyncadd [#allocation12], 0
      %s458 = sshll.u32 [#allocation11], 4
      %s459 = int_to_ptr.vmem [resolvable:$true] %s458
      %s460 = sshll.u32 %s6, 4
      %s461 = int_to_ptr.hbm [resolvable:$true] %s460
      %463 = dma.vmem_to_hbm [thread:$0]  %s459, 128, %s461, [#allocation12]
    $region45: #{tpu_custom_call.1} parent=1 // pred_fallthru
      _
    // Predicated region
    $region46: #{tpu_custom_call.1} parent=1 // pred_check
      _
    $region47: #{tpu_custom_call.1} parent=1 // pred_check_branch
      %465 = sbr.rel (0) target = $region49
    $region48: #{tpu_custom_call.1} parent=1 // pred_region
      %467 = dma.done [#allocation4], 128
    $region49: #{tpu_custom_call.1} parent=1 // pred_fallthru
      _
    // Predicated region
    $region50: #{tpu_custom_call.1} parent=1 // pred_check
      _
    $region51: #{tpu_custom_call.1} parent=1 // pred_check_branch
      %469 = sbr.rel (0) target = $region53
    $region52: #{tpu_custom_call.1} parent=1 // pred_region
      %471 = dma.done [#allocation12], 128
    $region53: #{tpu_custom_call.1} parent=1 // pred_fallthru
      _
    %472 = vsyncpa [#allocation3], 1
    %473 = vsyncpa [#allocation6], 1
    %474 = vsyncpa [#allocation9], 1
    %475 = vsyncpa [#allocation4], 1
    %476 = vsyncpa [#allocation12], 1

</llo_original>
